<compile_context>
chip_gen: v5e
topology: v5e:2x2
jax: 0.10.0
libtpu: 0.0.40
codegen_flags: <defaults>
</compile_context>

<pallas_src>
import functools

import jax
import jax.numpy as jnp
from jax.experimental import pallas as pl
from jax.experimental.pallas import tpu as pltpu

LANE = 128  # pad every feature axis to the 128-lane vreg width


# ----------------------------------------------------------------------------
# Pallas kernel: one fused SAGEConv (+ folded BN affine + ReLU) layer.
# ----------------------------------------------------------------------------
def _sage_layer_kernel(adj_ref, x_ref, wcat_ref, shift_ref, o_ref, *,
                       tile_n, apply_relu):
    # mean aggregation over neighbours: (tile_n, N) @ (N, 128) -> (tile_n, 128)
    agg = jnp.dot(adj_ref[...], x_ref[...], preferred_element_type=jnp.float32)

    # root/self rows are already resident in x_ref -> slice in-kernel
    row0 = pl.multiple_of(pl.program_id(0) * tile_n, tile_n)
    x_root = x_ref[pl.ds(row0, tile_n), :]

    # single fused linear: [agg | x_root] @ [W_l*scale ; W_r*scale]  (K = 256)
    feat = jnp.concatenate([agg.astype(jnp.bfloat16), x_root], axis=-1)
    h = jnp.dot(feat, wcat_ref[...], preferred_element_type=jnp.float32)
    h = h + shift_ref[...]          # folded (b_l*scale + beta - mean*scale)
    if apply_relu:
        h = jnp.maximum(h, 0.0)
    o_ref[...] = h.astype(o_ref.dtype)


def sage_layer(adj_bf16, x_bf16, w_cat, shift, *, apply_relu, tile_n,
               out_dtype):
    """One fused SAGEConv layer on padded, lane-dense (…,128) operands."""
    n_nodes, f_pad = x_bf16.shape
    f_out = w_cat.shape[1]
    assert n_nodes % tile_n == 0
    assert w_cat.shape[0] == 2 * f_pad

    kernel = functools.partial(_sage_layer_kernel, tile_n=tile_n,
                               apply_relu=apply_relu)

    return pl.pallas_call(
        kernel,
        out_shape=jax.ShapeDtypeStruct((n_nodes, f_out), out_dtype),
        grid=(n_nodes // tile_n,),
        in_specs=[
            # row-block of the normalized adjacency (bf16)
            pl.BlockSpec((tile_n, n_nodes), lambda i: (i, 0)),
            # full node features (bf16, resident; also supplies the root rows)
            pl.BlockSpec((n_nodes, f_pad), lambda i: (0, 0)),
            # fused weights [W_l*scale ; W_r*scale]  (2*128, 128) bf16
            pl.BlockSpec((2 * f_pad, f_out), lambda i: (0, 0)),
            # fused shift (1, 128) f32
            pl.BlockSpec((1, f_out), lambda i: (0, 0)),
        ],
        out_specs=pl.BlockSpec((tile_n, f_out), lambda i: (i, 0)),
        compiler_params=pltpu.CompilerParams(
            dimension_semantics=("parallel",)),
    )(adj_bf16, x_bf16, w_cat, shift)


# ----------------------------------------------------------------------------
# Glue: parameter init, folding/padding, adjacency construction, forward.
# ----------------------------------------------------------------------------
def init_params(key, in_feats, hidden_feats, out_feats, num_layers=2):
    """Deterministic params matching the module's __init__ shapes (eval BN)."""
    dims = [in_feats] + [hidden_feats] * (num_layers - 1) + [out_feats]
    params = []
    for layer in range(num_layers):
        f_in, f_out = dims[layer], dims[layer + 1]
        key, k1, k2 = jax.random.split(key, 3)
        # PyTorch Linear weight is (out, in); store transposed (in, out).
        w_l = jax.random.normal(k1, (f_in, f_out), jnp.float32) * 0.1
        b_l = jnp.zeros((f_out,), jnp.float32)
        w_r = jax.random.normal(k2, (f_in, f_out), jnp.float32) * 0.1
        if layer < num_layers - 1:
            # BatchNorm1d(hidden): gamma=1, beta=0, running stats 0/1, eps=1e-5
            bn = (jnp.ones((f_out,), jnp.float32),    # gamma
                  jnp.zeros((f_out,), jnp.float32),   # beta
                  jnp.zeros((f_out,), jnp.float32),   # running_mean
                  jnp.ones((f_out,), jnp.float32),    # running_var
                  1e-5)
        else:
            bn = None
        params.append(dict(w_l=w_l, b_l=b_l, w_r=w_r, bn=bn))
    return params


def _pad2d(a, rows, cols):
    return jnp.pad(a, ((0, rows - a.shape[0]), (0, cols - a.shape[1])))


def prepare_kernel_params(params):
    """Fold BN into weights, fuse [W_l;W_r], pad to 128 lanes, cast to bf16."""
    kparams = []
    for p in params:
        f_in, f_out = p["w_l"].shape
        assert f_in <= LANE and f_out <= LANE
        if p["bn"] is not None:
            gamma, beta, mean, var, eps = p["bn"]
            scale = gamma / jnp.sqrt(var + eps)
            shift = beta - mean * scale
        else:
            scale = jnp.ones((f_out,), jnp.float32)
            shift = jnp.zeros((f_out,), jnp.float32)
        w_l = _pad2d(p["w_l"] * scale, LANE, LANE)     # BN scale folded in
        w_r = _pad2d(p["w_r"] * scale, LANE, LANE)
        w_cat = jnp.concatenate([w_l, w_r], axis=0).astype(jnp.bfloat16)
        shift_tot = jnp.pad(p["b_l"] * scale + shift, (0, LANE - f_out))
        kparams.append(dict(w_cat=w_cat,
                            shift=shift_tot.reshape(1, LANE)))
    return kparams


def build_norm_adjacency(edge_index, num_nodes):
    """Dense row-normalized adjacency: (A_norm @ X)[i] = mean_{j->i} x_j."""
    src, dst = edge_index[0], edge_index[1]
    adj = jnp.zeros((num_nodes, num_nodes), jnp.float32)
    adj = adj.at[dst, src].add(1.0)          # messages flow src -> dst
    deg = adj.sum(axis=1, keepdims=True)
    return adj / jnp.maximum(deg, 1.0)       # zero in-degree -> all-zero row


def _choose_tile_n(n_nodes):
    if n_nodes >= 512:
        for t in (256, 128, 64, 32, 16, 8):   # MXU/sublane aligned tiles
            if n_nodes % t == 0:
                return t
        return n_nodes
    half = n_nodes // 2
    if n_nodes % 2 == 0 and half % 8 == 0:
        return half       # >= 2 grid steps keeps both v7x TensorCores busy
    return n_nodes


def graphsage_forward(params, x, edge_index, *, tile_n=None):
    # TODO(synk): training-mode dropout / batch-stat BatchNorm not implemented
    #             (forward here corresponds to model.eval()).
    n_nodes, in_feats = x.shape
    assert in_feats <= LANE
    out_feats = params[-1]["w_l"].shape[1]
    if tile_n is None:
        tile_n = _choose_tile_n(n_nodes)

    adj = build_norm_adjacency(edge_index, n_nodes).astype(jnp.bfloat16)
    h = _pad2d(x, n_nodes, LANE).astype(jnp.bfloat16)   # lane-dense features
    kparams = prepare_kernel_params(params)

    num_layers = len(kparams)
    for i, kp in enumerate(kparams):
        last = (i == num_layers - 1)
        h = sage_layer(adj, h, kp["w_cat"], kp["shift"],
                       apply_relu=not last, tile_n=tile_n,
                       out_dtype=jnp.float32 if last else jnp.bfloat16)
    return h[:, :out_feats]


# ----------------------------------------------------------------------------
# Pure-JAX f32 reference (module semantics) for a sanity check.
# ----------------------------------------------------------------------------
def graphsage_reference(params, x, edge_index):
    n_nodes = x.shape[0]
    adj = build_norm_adjacency(edge_index, n_nodes)
    h = x
    for p in params:
        out = (adj @ h) @ p["w_l"] + p["b_l"] + h @ p["w_r"]
        if p["bn"] is not None:
            gamma, beta, mean, var, eps = p["bn"]
            out = (out - mean) / jnp.sqrt(var + eps) * gamma + beta
            out = jnp.maximum(out, 0.0)
        h = out
    return h


if __name__ == "__main__":
    N_NODES = 128
    N_EDGES = 256
    IN_FEATS = 32
    HIDDEN_FEATS = 32
    OUT_FEATS = 16

    key = jax.random.PRNGKey(0)
    kx, ke, kp = jax.random.split(key, 3)

    x = jax.random.normal(kx, (N_NODES, IN_FEATS), jnp.float32)
    edge_index = jax.random.randint(ke, (2, N_EDGES), 0, N_NODES, jnp.int32)
    params = init_params(kp, IN_FEATS, HIDDEN_FEATS, OUT_FEATS, num_layers=2)

    out = graphsage_forward(params, x, edge_index)
    out = jax.block_until_ready(out)

    ref = graphsage_reference(params, x, edge_index)
    assert out.shape == (N_NODES, OUT_FEATS), out.shape
    max_err = float(jnp.max(jnp.abs(out - ref)))
    # bf16 operands in the kernel vs pure-f32 reference -> loose tolerance.
    assert jnp.allclose(out, ref, atol=6e-2, rtol=6e-2), max_err

    print("KERNEL_OK")
</pallas_src>

<mosaic_0001>
module attributes {stable_mosaic.version = 11 : i64} {
  func.func @_sage_layer_kernel(%arg0: i32, %arg1: memref<64x128xbf16, #tpu.memory_space<vmem>>, %arg2: memref<128x128xbf16, #tpu.memory_space<vmem>>, %arg3: memref<256x128xbf16, #tpu.memory_space<vmem>>, %arg4: memref<1x128xf32, #tpu.memory_space<vmem>>, %arg5: memref<64x128xbf16, #tpu.memory_space<vmem>>) attributes {dimension_semantics = [#tpu.dimension_semantics<parallel>], iteration_bounds = array<i64: 2>, scalar_prefetch = 0 : i64, scratch_operands = 0 : i64, tpu.core_type = #tpu.core_type<tc>, window_params = [{transform_indices = @transform_0, window_bounds = array<i64: 64, 128>}, {pipeline_mode = #tpu.pipeline_mode<synchronous>, transform_indices = @transform_1, window_bounds = array<i64: 128, 128>}, {pipeline_mode = #tpu.pipeline_mode<synchronous>, transform_indices = @transform_2, window_bounds = array<i64: 256, 128>}, {pipeline_mode = #tpu.pipeline_mode<synchronous>, transform_indices = @transform_3, window_bounds = array<i64: 1, 128>}, {transform_indices = @transform_4, window_bounds = array<i64: 64, 128>}]} {
    %c0 = arith.constant 0 : index
    %c0_0 = arith.constant 0 : index
    %0 = vector.load %arg1[%c0, %c0_0] : memref<64x128xbf16, #tpu.memory_space<vmem>>, vector<64x128xbf16>
    %c0_1 = arith.constant 0 : index
    %c0_2 = arith.constant 0 : index
    %1 = vector.load %arg2[%c0_1, %c0_2] : memref<128x128xbf16, #tpu.memory_space<vmem>>, vector<128x128xbf16>
    %cst = arith.constant dense<0.000000e+00> : vector<64x128xf32>
    %2 = tpu.matmul %0, %1, %cst {dimension_numbers = #tpu.dot_dimension_numbers<[1], [0], [0], [1], [0, 0, 1, 1], [], []>} : vector<64x128xbf16>, vector<128x128xbf16>, vector<64x128xf32> -> vector<64x128xf32>
    %c64_i32 = arith.constant 64 : i32
    %3 = arith.muli %arg0, %c64_i32 : i32
    %4 = tpu.assume_multiple %3, 64 : i32
    %5 = arith.index_cast %4 : i32 to index
    %c0_3 = arith.constant 0 : index
    %6 = vector.load %arg2[%5, %c0_3] : memref<128x128xbf16, #tpu.memory_space<vmem>>, vector<64x128xbf16>
    %7 = arith.truncf %2 : vector<64x128xf32> to vector<64x128xbf16>
    %8 = tpu.concatenate %7, %6 in 1 : vector<64x128xbf16>, vector<64x128xbf16> -> vector<64x256xbf16>
    %c0_4 = arith.constant 0 : index
    %c0_5 = arith.constant 0 : index
    %9 = vector.load %arg3[%c0_4, %c0_5] : memref<256x128xbf16, #tpu.memory_space<vmem>>, vector<256x128xbf16>
    %cst_6 = arith.constant dense<0.000000e+00> : vector<64x128xf32>
    %10 = tpu.matmul %8, %9, %cst_6 {dimension_numbers = #tpu.dot_dimension_numbers<[1], [0], [0], [1], [0, 0, 1, 1], [], []>} : vector<64x256xbf16>, vector<256x128xbf16>, vector<64x128xf32> -> vector<64x128xf32>
    %c0_7 = arith.constant 0 : index
    %c0_8 = arith.constant 0 : index
    %11 = vector.load %arg4[%c0_7, %c0_8] : memref<1x128xf32, #tpu.memory_space<vmem>>, vector<1x128xf32>
    %12 = vector.broadcast %11 : vector<1x128xf32> to vector<64x128xf32>
    %13 = arith.addf %10, %12 : vector<64x128xf32>
    %cst_9 = arith.constant 0.000000e+00 : f32
    %14 = vector.broadcast %cst_9 : f32 to vector<64x128xf32>
    %15 = arith.maximumf %13, %14 : vector<64x128xf32>
    %16 = arith.truncf %15 : vector<64x128xf32> to vector<64x128xbf16>
    %c0_10 = arith.constant 0 : index
    %c0_11 = arith.constant 0 : index
    %17 = vector.load %arg5[%c0_10, %c0_11] : memref<64x128xbf16, #tpu.memory_space<vmem>>, vector<64x128xbf16>
    tpu.vector_store %arg5[%c0_10, %c0_11], %16 {strides = array<i32>} : memref<64x128xbf16, #tpu.memory_space<vmem>>, vector<64x128xbf16>,
    return
  }
  func.func @transform_0(%arg0: i32) -> (i32, i32) {
    %c0_i32 = arith.constant 0 : i32
    %c0_i32_0 = arith.constant 0 : i32
    return %arg0, %c0_i32 : i32, i32
  }
  func.func @transform_1(%arg0: i32) -> (i32, i32) {
    %c0_i32 = arith.constant 0 : i32
    %c0_i32_0 = arith.constant 0 : i32
    %c0_i32_1 = arith.constant 0 : i32
    return %c0_i32, %c0_i32_0 : i32, i32
  }
  func.func @transform_2(%arg0: i32) -> (i32, i32) {
    %c0_i32 = arith.constant 0 : i32
    %c0_i32_0 = arith.constant 0 : i32
    %c0_i32_1 = arith.constant 0 : i32
    return %c0_i32, %c0_i32_0 : i32, i32
  }
  func.func @transform_3(%arg0: i32) -> (i32, i32) {
    %c0_i32 = arith.constant 0 : i32
    %c0_i32_0 = arith.constant 0 : i32
    %c0_i32_1 = arith.constant 0 : i32
    return %c0_i32, %c0_i32_0 : i32, i32
  }
  func.func @transform_4(%arg0: i32) -> (i32, i32) {
    %c0_i32 = arith.constant 0 : i32
    %c0_i32_0 = arith.constant 0 : i32
    return %arg0, %c0_i32 : i32, i32
  }
}

</mosaic_0001>

<llo_original>
// kernel: tpu_custom_call.1
$region0: #{tpu_custom_call.1}
  #allocation0 [shape = 'u32[]', space=smem, size = 0x4, offset = 0x4, fixed_abs, tag = 'smem constant byte address 0x4 - core index']
  #allocation1 [shape = 'u32[72,128]{1,0:T(1,128)}', space=vmem, size = 0x9000, scoped, tag = 'internal scratch']
  %s0 = inlined_call_operand.hbm [shape: bf16[128,128], index: 0, kind: input, shape index: {}]
  %s1 = inlined_call_operand.hbm [shape: bf16[128,128], index: 1, kind: input, shape index: {}]
  %s2 = inlined_call_operand.hbm [shape: bf16[256,128], index: 2, kind: input, shape index: {}]
  %s3 = inlined_call_operand.vmem [shape: f32[1,128], index: 3, kind: input, shape index: {}]
  %s4 = inlined_call_operand.hbm [shape: bf16[128,128], index: 4, kind: output, shape index: {}]
  %s5 = sld [smem:[#allocation0]]
  $region61: #{tpu_custom_call.1} parent=0
    _
  %s7 = ssub.s32 1, %s5
  %s8 = scalar_select 0, %s7, %s5
  $region1: #{tpu_custom_call.1} parent=0
    #allocation2 [shape = 'u8[32768]{0}', space=vmem, size = 0x8000, scoped, tag = 'input window, operand 0']
    #allocation3 [shape = 's32[2]{0}', space=sflag, size = 0x8, scoped, tag = 'scoped memory for tpu_custom_call.1']
    #allocation4 [shape = 's32[2]{0}', space=sflag, size = 0x8, scoped, tag = 'scoped memory for tpu_custom_call.1']
    #allocation5 [shape = 'u8[32768]{0}', space=vmem, size = 0x8000, scoped, tag = 'input window, operand 1, single buffered']
    #allocation6 [shape = 's32[1]{0}', space=sflag, size = 0x4, scoped, tag = 'scoped memory for tpu_custom_call.1']
    #allocation7 [shape = 'u8[65536]{0}', space=vmem, size = 0x10000, scoped, tag = 'input window, operand 2, single buffered']
    #allocation8 [shape = 'u8[32768]{0}', space=vmem, size = 0x8000, scoped, tag = 'output window, operand 0']
    %9 = vsyncpa [#allocation3], 0
    %s10 = scalar_lea.sflag [#allocation3], 1
    %11 = vsyncpa %s10, 0
    %12 = vsyncpa [#allocation6], 0
    %13 = vsyncpa [#allocation4], 0
    %s14 = scalar_lea.sflag [#allocation4], 1
    %15 = vsyncpa %s14, 0
    loop: start=0, step=1, limit=4
    $region2: #{tpu_custom_call.1} parent=1 // loop_pre_header
      _
    $region3: #{tpu_custom_call.1} parent=1 // loop_header
      %s17 = sphi 0, %s21
      %p18 = scmp.ge.s32.totalorder %s17, 4
      %s27 = sphi 0, %s29
      %s30 = sphi 0, %s27
      %s31 = sphi 0, %s30
      %s47 = sphi 0, %s31
      %s51 = sphi 0, %s51
      %s53 = sphi 0, %s51
      %s54 = sphi 0, %s53
      %s68 = sphi 0, %s54
      %s72 = sphi 0, %s72
      %s74 = sphi 0, %s72
      %s75 = sphi 0, %s74
      %s89 = sphi 0, %s75
      %s93 = sphi 0, %s93
      %s95 = sphi 0, %s93
      %s96 = sphi 0, %s95
      %s110 = sphi 0, %s96
      %s116 = sphi 0, %s118
      %s119 = sphi 0, %s116
      %s120 = sphi 0, %s119
      %s136 = sphi 0, %s120
    $region4: #{tpu_custom_call.1} parent=1 // loop_header_branch
      %20 = sbr.rel (%p18) target = $region8
    $region5: #{tpu_custom_call.1} parent=1 // loop_body
      %s22 = ssub.s32 %s17, 1
      %s23 = ssub.s32 %s17, 2
      %s24 = sadd.s32 %s17, 1
      %s25 = ssub.s32 %s17, %s24
      %p26 = scmp.eq.s32.totalorder %s25, 0
      %s28 = sadd.s32 %s27, 1
      %s29 = scalar_select %p26, %s27, %s28
      %p32 = pneg %p26
      %p33 = scmp.eq.s32.totalorder %s17, 1
      %p34 = por %p32, %p33
      %p35 = scmp.ne.s32.totalorder %s27, %s30
      %p36 = scmp.eq.s32.totalorder %s17, 0
      %p37 = por %p35, %p36
      %p38 = scmp.ne.s32.totalorder %s27, %s30
      %p39 = scmp.eq.s32.totalorder %s22, 1
      %p40 = por %p38, %p39
      %p41 = scmp.ne.s32.totalorder %s30, %s31
      %p42 = scmp.eq.s32.totalorder %s22, 0
      %p43 = por %p41, %p42
      %p44 = scmp.ne.s32.totalorder %s30, %s31
      %p45 = scmp.eq.s32.totalorder %s23, 1
      %p46 = por %p44, %p45
      %p48 = scmp.ne.s32.totalorder %s31, %s47
      %p49 = scmp.eq.s32.totalorder %s23, 0
      %p50 = por %p48, %p49
      %s52 = sadd.s32 %s51, 1
      %p55 = scmp.eq.s32.totalorder %s17, 1
      %p56 = scmp.ne.s32.totalorder %s51, %s53
      %p57 = scmp.eq.s32.totalorder %s17, 0
      %p58 = por %p56, %p57
      %p59 = scmp.ne.s32.totalorder %s51, %s53
      %p60 = scmp.eq.s32.totalorder %s22, 1
      %p61 = por %p59, %p60
      %p62 = scmp.ne.s32.totalorder %s53, %s54
      %p63 = scmp.eq.s32.totalorder %s22, 0
      %p64 = por %p62, %p63
      %p65 = scmp.ne.s32.totalorder %s53, %s54
      %p66 = scmp.eq.s32.totalorder %s23, 1
      %p67 = por %p65, %p66
      %p69 = scmp.ne.s32.totalorder %s54, %s68
      %p70 = scmp.eq.s32.totalorder %s23, 0
      %p71 = por %p69, %p70
      %s73 = sadd.s32 %s72, 1
      %p76 = scmp.eq.s32.totalorder %s17, 1
      %p77 = scmp.ne.s32.totalorder %s72, %s74
      %p78 = scmp.eq.s32.totalorder %s17, 0
      %p79 = por %p77, %p78
      %p80 = scmp.ne.s32.totalorder %s72, %s74
      %p81 = scmp.eq.s32.totalorder %s22, 1
      %p82 = por %p80, %p81
      %p83 = scmp.ne.s32.totalorder %s74, %s75
      %p84 = scmp.eq.s32.totalorder %s22, 0
      %p85 = por %p83, %p84
      %p86 = scmp.ne.s32.totalorder %s74, %s75
      %p87 = scmp.eq.s32.totalorder %s23, 1
      %p88 = por %p86, %p87
      %p90 = scmp.ne.s32.totalorder %s75, %s89
      %p91 = scmp.eq.s32.totalorder %s23, 0
      %p92 = por %p90, %p91
      %s94 = sadd.s32 %s93, 1
      %p97 = scmp.eq.s32.totalorder %s17, 1
      %p98 = scmp.ne.s32.totalorder %s93, %s95
      %p99 = scmp.eq.s32.totalorder %s17, 0
      %p100 = por %p98, %p99
      %p101 = scmp.ne.s32.totalorder %s93, %s95
      %p102 = scmp.eq.s32.totalorder %s22, 1
      %p103 = por %p101, %p102
      %p104 = scmp.ne.s32.totalorder %s95, %s96
      %p105 = scmp.eq.s32.totalorder %s22, 0
      %p106 = por %p104, %p105
      %p107 = scmp.ne.s32.totalorder %s95, %s96
      %p108 = scmp.eq.s32.totalorder %s23, 1
      %p109 = por %p107, %p108
      %p111 = scmp.ne.s32.totalorder %s96, %s110
      %p112 = scmp.eq.s32.totalorder %s23, 0
      %p113 = por %p111, %p112
      %s114 = ssub.s32 %s17, %s24
      %p115 = scmp.eq.s32.totalorder %s114, 0
      %s117 = sadd.s32 %s116, 1
      %s118 = scalar_select %p115, %s116, %s117
      %p121 = pneg %p115
      %p122 = scmp.eq.s32.totalorder %s17, 1
      %p123 = por %p121, %p122
      %p124 = scmp.ne.s32.totalorder %s116, %s119
      %p125 = scmp.eq.s32.totalorder %s17, 0
      %p126 = por %p124, %p125
      %p127 = scmp.ne.s32.totalorder %s116, %s119
      %p128 = scmp.eq.s32.totalorder %s22, 1
      %p129 = por %p127, %p128
      %p130 = scmp.ne.s32.totalorder %s119, %s120
      %p131 = scmp.eq.s32.totalorder %s22, 0
      %p132 = por %p130, %p131
      %p133 = scmp.ne.s32.totalorder %s119, %s120
      %p134 = scmp.eq.s32.totalorder %s23, 1
      %p135 = por %p133, %p134
      %p137 = scmp.ne.s32.totalorder %s120, %s136
      %p138 = scmp.eq.s32.totalorder %s23, 0
      %p139 = por %p137, %p138
      %p140 = scmp.le.s32.totalorder 1, %s17
      %p141 = scmp.lt.s32.totalorder %s17, 3
      %p142 = pnand %p140, %p141
      %p143 = pneg %p142
      // Predicated region
      $region9: #{tpu_custom_call.1} parent=5 // pred_check
        _
      $region10: #{tpu_custom_call.1} parent=5 // pred_check_branch
        %145 = sbr.rel (%p142) target = $region12
      $region11: #{tpu_custom_call.1} parent=5 // pred_region
        %s146 = ssub.s32 %s17, 1
        // Predicated region
        $region13: #{tpu_custom_call.1} parent=11 // pred_check
          %p147 = pneg %p64
        $region14: #{tpu_custom_call.1} parent=11 // pred_check_branch
          %149 = sbr.rel (%p147) target = $region16
        $region15: #{tpu_custom_call.1} parent=11 // pred_region
          %151 = vsyncadd [#allocation6], 0
          %s152 = sshll.u32 %s1, 4
          %s153 = int_to_ptr.hbm [resolvable:$true] %s152
          %s154 = sshll.u32 [#allocation5], 4
          %s155 = int_to_ptr.vmem [resolvable:$true] %s154
          %160 = dma.hbm_to_vmem [thread:$0]  %s153, 1024, %s155, [#allocation6], 64, 64, 4
        $region16: #{tpu_custom_call.1} parent=11 // pred_fallthru
          _
        // Predicated region
        $region17: #{tpu_custom_call.1} parent=11 // pred_check
          %p161 = pneg %p85
        $region18: #{tpu_custom_call.1} parent=11 // pred_check_branch
          %163 = sbr.rel (%p161) target = $region20
        $region19: #{tpu_custom_call.1} parent=11 // pred_region
          %165 = vsyncadd [#allocation6], 0
          %s166 = sshll.u32 %s2, 4
          %s167 = int_to_ptr.hbm [resolvable:$true] %s166
          %s168 = sshll.u32 [#allocation7], 4
          %s169 = int_to_ptr.vmem [resolvable:$true] %s168
          %174 = dma.hbm_to_vmem [thread:$0]  %s167, 2048, %s169, [#allocation6], 64, 64, 4
        $region20: #{tpu_custom_call.1} parent=11 // pred_fallthru
          _
        // Predicated region
        $region21: #{tpu_custom_call.1} parent=11 // pred_check
          %p175 = pneg %p106
        $region22: #{tpu_custom_call.1} parent=11 // pred_check_branch
          %177 = sbr.rel (%p175) target = $region24
        $region23: #{tpu_custom_call.1} parent=11 // pred_region
          _
        $region24: #{tpu_custom_call.1} parent=11 // pred_fallthru
          _
      $region12: #{tpu_custom_call.1} parent=5 // pred_fallthru
        _
      %p178 = scmp.lt.s32.totalorder %s17, 2
      // Predicated region
      $region25: #{tpu_custom_call.1} parent=5 // pred_check
        %p179 = pneg %p178
      $region26: #{tpu_custom_call.1} parent=5 // pred_check_branch
        %181 = sbr.rel (%p179) target = $region28
      $region27: #{tpu_custom_call.1} parent=5 // pred_region
        // Predicated region
        $region29: #{tpu_custom_call.1} parent=27 // pred_check
          %p182 = pneg %p37
        $region30: #{tpu_custom_call.1} parent=27 // pred_check_branch
          %184 = sbr.rel (%p182) target = $region32
        $region31: #{tpu_custom_call.1} parent=27 // pred_region
          %s185 = sand.u32 %s27, 1
          %s186 = scalar_lea.sflag [#allocation3], %s185
          %s187 = sand.u32 %s27, 1
          %s188 = smul.addr %s187, 32
          %s189 = scalar_lea.vmem [#allocation2], %s188
          %s190 = smul.u32 8, %s17
          %192 = vsyncadd %s186, 0
          %s193 = smul.addr %s190, 4
          %s194 = scalar_lea.hbm %s0, %s193
          %s195 = sshll.u32 %s194, 4
          %s196 = int_to_ptr.hbm [resolvable:$true] %s195
          %s197 = sshll.u32 %s189, 4
          %s198 = int_to_ptr.vmem [resolvable:$true] %s197
          %203 = dma.hbm_to_vmem [thread:$0]  %s196, 512, %s198, %s186, 64, 64, 4
        $region32: #{tpu_custom_call.1} parent=27 // pred_fallthru
          _
      $region28: #{tpu_custom_call.1} parent=5 // pred_fallthru
        _
      %p204 = scmp.le.s32.totalorder 1, %s17
      %p205 = scmp.lt.s32.totalorder %s17, 3
      %p206 = pnand %p204, %p205
      %p207 = pneg %p206
      // Predicated region
      $region33: #{tpu_custom_call.1} parent=5 // pred_check
        _
      $region34: #{tpu_custom_call.1} parent=5 // pred_check_branch
        %209 = sbr.rel (%p206) target = $region36
      $region35: #{tpu_custom_call.1} parent=5 // pred_region
        %s210 = ssub.s32 %s17, 1
        %s211 = sand.u32 %s30, 1
        %s212 = scalar_lea.sflag [#allocation3], %s211
        %s213 = sand.u32 %s30, 1
        %s214 = smul.addr %s213, 32
        %s215 = scalar_lea.vmem [#allocation2], %s214
        // Predicated region
        $region37: #{tpu_custom_call.1} parent=35 // pred_check
          %p216 = pneg %p43
        $region38: #{tpu_custom_call.1} parent=35 // pred_check_branch
          %218 = sbr.rel (%p216) target = $region40
        $region39: #{tpu_custom_call.1} parent=35 // pred_region
          %220 = dma.done %s212, 512
        $region40: #{tpu_custom_call.1} parent=35 // pred_fallthru
          _
        // Predicated region
        $region41: #{tpu_custom_call.1} parent=35 // pred_check
          %p221 = pneg %p64
        $region42: #{tpu_custom_call.1} parent=35 // pred_check_branch
          %223 = sbr.rel (%p221) target = $region44
        $region43: #{tpu_custom_call.1} parent=35 // pred_region
          %225 = dma.done [#allocation6], 1024
        $region44: #{tpu_custom_call.1} parent=35 // pred_fallthru
          _
        // Predicated region
        $region45: #{tpu_custom_call.1} parent=35 // pred_check
          %p226 = pneg %p85
        $region46: #{tpu_custom_call.1} parent=35 // pred_check_branch
          %228 = sbr.rel (%p226) target = $region48
        $region47: #{tpu_custom_call.1} parent=35 // pred_region
          %230 = dma.done [#allocation6], 2048
        $region48: #{tpu_custom_call.1} parent=35 // pred_fallthru
          _
        %s231 = sand.u32 %s30, 1
        %s232 = scalar_lea.sflag [#allocation3], %s231
        %s233 = sand.u32 %s30, 1
        %s234 = smul.addr %s233, 32
        %s235 = scalar_lea.vmem [#allocation2], %s234
        %p236 = pneg %p43
        %p237 = pneg %p40
        %p238 = pneg %p64
        %p239 = pneg %p61
        %p240 = pneg %p85
        %p241 = pneg %p82
        %p242 = pneg %p106
        %p243 = pneg %p103
        %p244 = pneg %p132
        %p245 = pneg %p129
        %s246 = sand.u32 %s119, 1
        %s247 = scalar_lea.sflag [#allocation4], %s246
        %s248 = sand.u32 %s119, 1
        %s249 = smul.addr %s248, 32
        %s250 = scalar_lea.vmem [#allocation8], %s249
        %s251 = smul.u32 8, %s22
        %s252 = smul.u32 8, %s22
        %v253 = vld [vmem:[%s215] sm:$0xf]
        %v254 = vld [vmem:[%s215 + $0x4] sm:$0xf]
        %v255 = vld [vmem:[%s215 + $0x8] sm:$0xf]
        %v256 = vld [vmem:[%s215 + $0xc] sm:$0xf]
        %v257 = vld [vmem:[%s215 + $0x10] sm:$0xf]
        %v258 = vld [vmem:[%s215 + $0x14] sm:$0xf]
        %v259 = vld [vmem:[%s215 + $0x18] sm:$0xf]
        %v260 = vld [vmem:[%s215 + $0x1c] sm:$0xf]
        %v261 = vld [vmem:[#allocation5] sm:$0xf]
        %v262 = vld [vmem:[#allocation5 + $0x4] sm:$0xf]
        %v263 = vld [vmem:[#allocation5 + $0x8] sm:$0xf]
        %v264 = vld [vmem:[#allocation5 + $0xc] sm:$0xf]
        %v265 = vld [vmem:[#allocation5 + $0x10] sm:$0xf]
        %v266 = vld [vmem:[#allocation5 + $0x14] sm:$0xf]
        %v267 = vld [vmem:[#allocation5 + $0x18] sm:$0xf]
        %v268 = vld [vmem:[#allocation5 + $0x1c] sm:$0xf]
        %v269 = vld [vmem:[#allocation5 + $0x20] sm:$0xf]
        %v270 = vld [vmem:[#allocation5 + $0x24] sm:$0xf]
        %v271 = vld [vmem:[#allocation5 + $0x28] sm:$0xf]
        %v272 = vld [vmem:[#allocation5 + $0x2c] sm:$0xf]
        %v273 = vld [vmem:[#allocation5 + $0x30] sm:$0xf]
        %v274 = vld [vmem:[#allocation5 + $0x34] sm:$0xf]
        %v275 = vld [vmem:[#allocation5 + $0x38] sm:$0xf]
        %v276 = vld [vmem:[#allocation5 + $0x3c] sm:$0xf]
        %v285 = vunpack.c.l.b16 %v253
        %v286 = vunpack.c.l.b16 %v254
        %v287 = vunpack.c.l.b16 %v255
        %v288 = vunpack.c.l.b16 %v256
        %v289 = vunpack.c.l.b16 %v257
        %v290 = vunpack.c.l.b16 %v258
        %v291 = vunpack.c.l.b16 %v259
        %v292 = vunpack.c.l.b16 %v260
        %v293 = vpack.c.b16 %v286, %v285
        %v294 = vpack.c.b16 %v288, %v287
        %v295 = vpack.c.b16 %v290, %v289
        %v296 = vpack.c.b16 %v292, %v291
        %v317 = vunpack.c.l.b16 %v261
        %v318 = vunpack.c.l.b16 %v262
        %v319 = vunpack.c.l.b16 %v263
        %v320 = vunpack.c.l.b16 %v264
        %v321 = vunpack.c.l.b16 %v265
        %v322 = vunpack.c.l.b16 %v266
        %v323 = vunpack.c.l.b16 %v267
        %v324 = vunpack.c.l.b16 %v268
        %v325 = vunpack.c.l.b16 %v269
        %v326 = vunpack.c.l.b16 %v270
        %v327 = vunpack.c.l.b16 %v271
        %v328 = vunpack.c.l.b16 %v272
        %v329 = vunpack.c.l.b16 %v273
        %v330 = vunpack.c.l.b16 %v274
        %v331 = vunpack.c.l.b16 %v275
        %v332 = vunpack.c.l.b16 %v276
        %v333 = vpack.c.b16 %v318, %v317
        %v334 = vpack.c.b16 %v320, %v319
        %v335 = vpack.c.b16 %v322, %v321
        %v336 = vpack.c.b16 %v324, %v323
        %v337 = vpack.c.b16 %v326, %v325
        %v338 = vpack.c.b16 %v328, %v327
        %v339 = vpack.c.b16 %v330, %v329
        %v340 = vpack.c.b16 %v332, %v331
        %349 = vmatpush.bf16.msra.mxu0 %v340
        %350 = vmatpush.bf16.msra.mxu0 %v339
        %351 = vmatpush.bf16.msra.mxu0 %v338
        %352 = vmatpush.bf16.msra.mxu0 %v337
        %353 = vmatpush.bf16.msra.mxu0 %v336
        %354 = vmatpush.bf16.msra.mxu0 %v335
        %355 = vmatpush.bf16.msra.mxu0 %v334
        %356 = vmatpush.bf16.msra.mxu0 %v333
        %357 = vmatmul.bf16.gmra.mxu0 %v293
        %v358 = vpop.f32.mrf.mxu0
        %v359 = vadd.f32 0.0, %v358
        %v360 = vpop.f32.mrf.mxu0
        %v361 = vadd.f32 0.0, %v360
        %362 = vmatmul.bf16.gmra.mxu0 %v294
        %v363 = vpop.f32.mrf.mxu0
        %v364 = vadd.f32 0.0, %v363
        %v365 = vpop.f32.mrf.mxu0
        %v366 = vadd.f32 0.0, %v365
        %367 = vmatmul.bf16.gmra.mxu0 %v295
        %v368 = vpop.f32.mrf.mxu0
        %v369 = vadd.f32 0.0, %v368
        %v370 = vpop.f32.mrf.mxu0
        %v371 = vadd.f32 0.0, %v370
        %372 = vmatmul.bf16.gmra.mxu0 %v296
        %v373 = vpop.f32.mrf.mxu0
        %v374 = vadd.f32 0.0, %v373
        %v375 = vpop.f32.mrf.mxu0
        %v376 = vadd.f32 0.0, %v375
        %377 = vdwg.mxu0
        %s378 = smul.u32 %s22, 64
        %s379 = sshra.s32 %s378, 3
        %s380 = sand.u32 %s378, 7
        %s381 = smul.addr %s379, 4
        %s382 = scalar_lea.vmem [#allocation5], %s381
        %v383 = vld [vmem:[%s382] sm:$0xf]
        %v384 = vld [vmem:[%s382 + $0x4] sm:$0xf]
        %v385 = vld [vmem:[%s382 + $0x8] sm:$0xf]
        %v386 = vld [vmem:[%s382 + $0xc] sm:$0xf]
        %v387 = vld [vmem:[%s382 + $0x10] sm:$0xf]
        %v388 = vld [vmem:[%s382 + $0x14] sm:$0xf]
        %v389 = vld [vmem:[%s382 + $0x18] sm:$0xf]
        %v390 = vld [vmem:[%s382 + $0x1c] sm:$0xf]
        %v391 = vpack.c.bf16 %v359, %v359
        %v392 = vpack.c.bf16 %v361, %v361
        %v393 = vpack.c.bf16 %v364, %v364
        %v394 = vpack.c.bf16 %v366, %v366
        %v395 = vpack.c.bf16 %v369, %v369
        %v396 = vpack.c.bf16 %v371, %v371
        %v397 = vpack.c.bf16 %v374, %v374
        %v398 = vpack.c.bf16 %v376, %v376
        %v407 = vunpack.c.l.b16 %v391
        %v408 = vunpack.c.l.b16 %v392
        %v409 = vunpack.c.l.b16 %v393
        %v410 = vunpack.c.l.b16 %v394
        %v411 = vunpack.c.l.b16 %v395
        %v412 = vunpack.c.l.b16 %v396
        %v413 = vunpack.c.l.b16 %v397
        %v414 = vunpack.c.l.b16 %v398
        %v415 = vpack.c.b16 %v408, %v407
        %v416 = vpack.c.b16 %v410, %v409
        %v417 = vpack.c.b16 %v412, %v411
        %v418 = vpack.c.b16 %v414, %v413
        %v431 = vunpack.c.l.b16 %v383
        %v432 = vunpack.c.l.b16 %v384
        %v433 = vunpack.c.l.b16 %v385
        %v434 = vunpack.c.l.b16 %v386
        %v435 = vunpack.c.l.b16 %v387
        %v436 = vunpack.c.l.b16 %v388
        %v437 = vunpack.c.l.b16 %v389
        %v438 = vunpack.c.l.b16 %v390
        %v439 = vpack.c.b16 %v432, %v431
        %v440 = vpack.c.b16 %v434, %v433
        %v441 = vpack.c.b16 %v436, %v435
        %v442 = vpack.c.b16 %v438, %v437
        %v447 = vld [vmem:[#allocation7] sm:$0xf]
        %v448 = vld [vmem:[#allocation7 + $0x4] sm:$0xf]
        %v449 = vld [vmem:[#allocation7 + $0x8] sm:$0xf]
        %v450 = vld [vmem:[#allocation7 + $0xc] sm:$0xf]
        %v451 = vld [vmem:[#allocation7 + $0x10] sm:$0xf]
        %v452 = vld [vmem:[#allocation7 + $0x14] sm:$0xf]
        %v453 = vld [vmem:[#allocation7 + $0x18] sm:$0xf]
        %v454 = vld [vmem:[#allocation7 + $0x1c] sm:$0xf]
        %v455 = vld [vmem:[#allocation7 + $0x20] sm:$0xf]
        %v456 = vld [vmem:[#allocation7 + $0x24] sm:$0xf]
        %v457 = vld [vmem:[#allocation7 + $0x28] sm:$0xf]
        %v458 = vld [vmem:[#allocation7 + $0x2c] sm:$0xf]
        %v459 = vld [vmem:[#allocation7 + $0x30] sm:$0xf]
        %v460 = vld [vmem:[#allocation7 + $0x34] sm:$0xf]
        %v461 = vld [vmem:[#allocation7 + $0x38] sm:$0xf]
        %v462 = vld [vmem:[#allocation7 + $0x3c] sm:$0xf]
        %v463 = vld [vmem:[#allocation7 + $0x40] sm:$0xf]
        %v464 = vld [vmem:[#allocation7 + $0x44] sm:$0xf]
        %v465 = vld [vmem:[#allocation7 + $0x48] sm:$0xf]
        %v466 = vld [vmem:[#allocation7 + $0x4c] sm:$0xf]
        %v467 = vld [vmem:[#allocation7 + $0x50] sm:$0xf]
        %v468 = vld [vmem:[#allocation7 + $0x54] sm:$0xf]
        %v469 = vld [vmem:[#allocation7 + $0x58] sm:$0xf]
        %v470 = vld [vmem:[#allocation7 + $0x5c] sm:$0xf]
        %v471 = vld [vmem:[#allocation7 + $0x60] sm:$0xf]
        %v472 = vld [vmem:[#allocation7 + $0x64] sm:$0xf]
        %v473 = vld [vmem:[#allocation7 + $0x68] sm:$0xf]
        %v474 = vld [vmem:[#allocation7 + $0x6c] sm:$0xf]
        %v475 = vld [vmem:[#allocation7 + $0x70] sm:$0xf]
        %v476 = vld [vmem:[#allocation7 + $0x74] sm:$0xf]
        %v477 = vld [vmem:[#allocation7 + $0x78] sm:$0xf]
        %v478 = vld [vmem:[#allocation7 + $0x7c] sm:$0xf]
        %v479 = vld [vmem:[%s3] sm:$0x1]
        %v481 = vperm.slane %v479, 0
        %v515 = vunpack.c.l.b16 %v447
        %v516 = vunpack.c.l.b16 %v448
        %v517 = vunpack.c.l.b16 %v449
        %v518 = vunpack.c.l.b16 %v450
        %v519 = vunpack.c.l.b16 %v451
        %v520 = vunpack.c.l.b16 %v452
        %v521 = vunpack.c.l.b16 %v453
        %v522 = vunpack.c.l.b16 %v454
        %v523 = vunpack.c.l.b16 %v455
        %v524 = vunpack.c.l.b16 %v456
        %v525 = vunpack.c.l.b16 %v457
        %v526 = vunpack.c.l.b16 %v458
        %v527 = vunpack.c.l.b16 %v459
        %v528 = vunpack.c.l.b16 %v460
        %v529 = vunpack.c.l.b16 %v461
        %v530 = vunpack.c.l.b16 %v462
        %v531 = vunpack.c.l.b16 %v463
        %v532 = vunpack.c.l.b16 %v464
        %v533 = vunpack.c.l.b16 %v465
        %v534 = vunpack.c.l.b16 %v466
        %v535 = vunpack.c.l.b16 %v467
        %v536 = vunpack.c.l.b16 %v468
        %v537 = vunpack.c.l.b16 %v469
        %v538 = vunpack.c.l.b16 %v470
        %v539 = vunpack.c.l.b16 %v471
        %v540 = vunpack.c.l.b16 %v472
        %v541 = vunpack.c.l.b16 %v473
        %v542 = vunpack.c.l.b16 %v474
        %v543 = vunpack.c.l.b16 %v475
        %v544 = vunpack.c.l.b16 %v476
        %v545 = vunpack.c.l.b16 %v477
        %v546 = vunpack.c.l.b16 %v478
        %v547 = vpack.c.b16 %v516, %v515
        %v548 = vpack.c.b16 %v518, %v517
        %v549 = vpack.c.b16 %v520, %v519
        %v550 = vpack.c.b16 %v522, %v521
        %v551 = vpack.c.b16 %v524, %v523
        %v552 = vpack.c.b16 %v526, %v525
        %v553 = vpack.c.b16 %v528, %v527
        %v554 = vpack.c.b16 %v530, %v529
        %v555 = vpack.c.b16 %v532, %v531
        %v556 = vpack.c.b16 %v534, %v533
        %v557 = vpack.c.b16 %v536, %v535
        %v558 = vpack.c.b16 %v538, %v537
        %v559 = vpack.c.b16 %v540, %v539
        %v560 = vpack.c.b16 %v542, %v541
        %v561 = vpack.c.b16 %v544, %v543
        %v562 = vpack.c.b16 %v546, %v545
        %579 = vmatpush.bf16.msra.mxu0 %v554
        %580 = vmatpush.bf16.msra.mxu0 %v553
        %581 = vmatpush.bf16.msra.mxu0 %v552
        %582 = vmatpush.bf16.msra.mxu0 %v551
        %583 = vmatpush.bf16.msra.mxu0 %v550
        %584 = vmatpush.bf16.msra.mxu0 %v549
        %585 = vmatpush.bf16.msra.mxu0 %v548
        %586 = vmatpush.bf16.msra.mxu0 %v547
        %587 = vmatmul.bf16.gmra.mxu0 %v415
        %v588 = vpop.f32.mrf.mxu0
        %v589 = vadd.f32 %v481, %v588
        %v590 = vpop.f32.mrf.mxu0
        %v591 = vadd.f32 %v481, %v590
        %592 = vmatmul.bf16.gmra.mxu0 %v416
        %v593 = vpop.f32.mrf.mxu0
        %v594 = vadd.f32 %v481, %v593
        %v595 = vpop.f32.mrf.mxu0
        %v596 = vadd.f32 %v481, %v595
        %597 = vmatmul.bf16.gmra.mxu0 %v417
        %v598 = vpop.f32.mrf.mxu0
        %v599 = vadd.f32 %v481, %v598
        %v600 = vpop.f32.mrf.mxu0
        %v601 = vadd.f32 %v481, %v600
        %602 = vmatmul.bf16.gmra.mxu0 %v418
        %v603 = vpop.f32.mrf.mxu0
        %v604 = vadd.f32 %v481, %v603
        %v605 = vpop.f32.mrf.mxu0
        %v606 = vadd.f32 %v481, %v605
        %607 = vdwg.mxu0
        %608 = vmatpush.bf16.msra.mxu0 %v562
        %609 = vmatpush.bf16.msra.mxu0 %v561
        %610 = vmatpush.bf16.msra.mxu0 %v560
        %611 = vmatpush.bf16.msra.mxu0 %v559
        %612 = vmatpush.bf16.msra.mxu0 %v558
        %613 = vmatpush.bf16.msra.mxu0 %v557
        %614 = vmatpush.bf16.msra.mxu0 %v556
        %615 = vmatpush.bf16.msra.mxu0 %v555
        %616 = vmatmul.bf16.gmra.mxu0 %v439
        %v617 = vpop.f32.mrf.mxu0
        %v618 = vadd.f32 %v589, %v617
        %v619 = vpop.f32.mrf.mxu0
        %v620 = vadd.f32 %v591, %v619
        %621 = vmatmul.bf16.gmra.mxu0 %v440
        %v622 = vpop.f32.mrf.mxu0
        %v623 = vadd.f32 %v594, %v622
        %v624 = vpop.f32.mrf.mxu0
        %v625 = vadd.f32 %v596, %v624
        %626 = vmatmul.bf16.gmra.mxu0 %v441
        %v627 = vpop.f32.mrf.mxu0
        %v628 = vadd.f32 %v599, %v627
        %v629 = vpop.f32.mrf.mxu0
        %v630 = vadd.f32 %v601, %v629
        %631 = vmatmul.bf16.gmra.mxu0 %v442
        %v632 = vpop.f32.mrf.mxu0
        %v633 = vadd.f32 %v604, %v632
        %v634 = vpop.f32.mrf.mxu0
        %v635 = vadd.f32 %v606, %v634
        %636 = vdwg.mxu0
        %v637 = vmax.f32 %v618, 0.0
        %v638 = vmax.f32 %v620, 0.0
        %v639 = vmax.f32 %v623, 0.0
        %v640 = vmax.f32 %v625, 0.0
        %v641 = vmax.f32 %v628, 0.0
        %v642 = vmax.f32 %v630, 0.0
        %v643 = vmax.f32 %v633, 0.0
        %v644 = vmax.f32 %v635, 0.0
        %v645 = vpack.c.bf16 %v637, %v637
        %v646 = vpack.c.bf16 %v638, %v638
        %v647 = vpack.c.bf16 %v639, %v639
        %v648 = vpack.c.bf16 %v640, %v640
        %v649 = vpack.c.bf16 %v641, %v641
        %v650 = vpack.c.bf16 %v642, %v642
        %v651 = vpack.c.bf16 %v643, %v643
        %v652 = vpack.c.bf16 %v644, %v644
        %653 = vst [vmem:[%s250] sm:$0xf] %v645
        %654 = vst [vmem:[%s250 + $0x4] sm:$0xf] %v646
        %655 = vst [vmem:[%s250 + $0x8] sm:$0xf] %v647
        %656 = vst [vmem:[%s250 + $0xc] sm:$0xf] %v648
        %657 = vst [vmem:[%s250 + $0x10] sm:$0xf] %v649
        %658 = vst [vmem:[%s250 + $0x14] sm:$0xf] %v650
        %659 = vst [vmem:[%s250 + $0x18] sm:$0xf] %v651
        %660 = vst [vmem:[%s250 + $0x1c] sm:$0xf] %v652
        %s661 = sand.u32 %s119, 1
        %s662 = scalar_lea.sflag [#allocation4], %s661
        %s663 = sand.u32 %s119, 1
        %s664 = smul.addr %s663, 32
        %s665 = scalar_lea.vmem [#allocation8], %s664
        // Predicated region
        $region49: #{tpu_custom_call.1} parent=35 // pred_check
          %p666 = pneg %p129
        $region50: #{tpu_custom_call.1} parent=35 // pred_check_branch
          %668 = sbr.rel (%p666) target = $region52
        $region51: #{tpu_custom_call.1} parent=35 // pred_region
          %s669 = smul.u32 8, %s22
          %671 = vsyncadd %s662, 0
          %s672 = smul.addr %s669, 4
          %s673 = scalar_lea.hbm %s4, %s672
          %s674 = sshll.u32 %s665, 4
          %s675 = int_to_ptr.vmem [resolvable:$true] %s674
          %s676 = sshll.u32 %s673, 4
          %s677 = int_to_ptr.hbm [resolvable:$true] %s676
          %682 = dma.vmem_to_hbm [thread:$0]  %s675, 512, %s677, %s662, 64, 64, 4
        $region52: #{tpu_custom_call.1} parent=35 // pred_fallthru
          _
      $region36: #{tpu_custom_call.1} parent=5 // pred_fallthru
        _
      %p683 = scmp.le.s32.totalorder 2, %s17
      // Predicated region
      $region53: #{tpu_custom_call.1} parent=5 // pred_check
        %p684 = pneg %p683
      $region54: #{tpu_custom_call.1} parent=5 // pred_check_branch
        %686 = sbr.rel (%p684) target = $region56
      $region55: #{tpu_custom_call.1} parent=5 // pred_region
        %s687 = ssub.s32 %s17, 2
        // Predicated region
        $region57: #{tpu_custom_call.1} parent=55 // pred_check
          %p688 = pneg %p135
        $region58: #{tpu_custom_call.1} parent=55 // pred_check_branch
          %690 = sbr.rel (%p688) target = $region60
        $region59: #{tpu_custom_call.1} parent=55 // pred_region
          %s691 = sand.u32 %s120, 1
          %s692 = scalar_lea.sflag [#allocation4], %s691
          %s693 = sand.u32 %s120, 1
          %s694 = smul.addr %s693, 32
          %s695 = scalar_lea.vmem [#allocation8], %s694
          %697 = dma.done %s692, 512
        $region60: #{tpu_custom_call.1} parent=55 // pred_fallthru
          _
      $region56: #{tpu_custom_call.1} parent=5 // pred_fallthru
        _
    $region6: #{tpu_custom_call.1} parent=1 // loop_footer
      %s21 = sadd.s32 1, %s17
    $region7: #{tpu_custom_call.1} parent=1 // loop_footer_branch
      %16 = sbr.rel target = $region3
    $region8: #{tpu_custom_call.1} parent=1 // loop_exit
      _
    %698 = vsyncpa [#allocation3], 1
    %s699 = scalar_lea.sflag [#allocation3], 1
    %700 = vsyncpa %s699, 1
    %701 = vsyncpa [#allocation6], 1
    %702 = vsyncpa [#allocation4], 1
    %s703 = scalar_lea.sflag [#allocation4], 1
    %704 = vsyncpa %s703, 1

</llo_original>
